<compile_context>
chip_gen: v7x
topology: tpu7x:2x2x1
jax: 0.10.0
libtpu: 0.0.40
codegen_flags: <defaults>
</compile_context>

<pallas_src>
import functools

import jax
import jax.numpy as jnp
from jax.experimental import pallas as pl
from jax.experimental.pallas import tpu as pltpu


def _round_up(x, m):
    return ((x + m - 1) // m) * m


_VMEM_BUDGET_BYTES = 8 * 1024 * 1024   # safe under v5e 16 MiB scoped default
_MAX_CHUNK_ROWS = 256                   # keeps f32 conv temp <= 32 vregs


def _pick_hw_tile(hw, k, c_pad, budget_bytes=_VMEM_BUDGET_BYTES):
    """Largest spatial tile (patch-matrix rows) whose VMEM footprint fits."""
    hw8 = _round_up(hw, 8)
    for t in (8192, 4096, 2048, 1024, 512, 256, 128, 64, 32, 16, 8):
        if t > hw8:
            continue
        chunk = min(t, _MAX_CHUNK_ROWS)
        patch_bytes = t * k * 2 * 2            # bf16 tile, double-buffered
        conv_bytes = chunk * c_pad * 4         # live f32 intermediate
        weight_bytes = k * c_pad * 2 + c_pad * 4
        acc_bytes = 8 * c_pad * 4
        out_bytes = 2 * c_pad * 4
        if (patch_bytes + conv_bytes + weight_bytes + acc_bytes + out_bytes
                <= budget_bytes):
            return t
    return 8


# ----------------------------- Pallas kernel -------------------------------
def conv_pool_kernel(patches_ref, wc_ref, bc_ref, pooled_ref, acc_ref, *,
                     hw, thw, chunk, inv_hw):
    """One (batch image, spatial tile) grid step.

    patches_ref: (1, THW, K)    bf16   im2col patches for this spatial tile
    wc_ref:      (K, C_pad)     bf16   conv weights (channels zero-padded)
    bc_ref:      (1, C_pad)     f32    conv bias
    pooled_ref:  (1, 1, C_pad)  f32    global-average-pooled channels
    acc_ref:     (8, C_pad)     f32    per-sublane running spatial sums
    """
    t = pl.program_id(1)
    c_pad = wc_ref.shape[1]

    @pl.when(t == 0)
    def _():
        acc_ref[...] = jnp.zeros_like(acc_ref)

    wc = wc_ref[...]
    bias = bc_ref[...]                                    # (1, C_pad) f32
    n_chunks = thw // chunk
    need_mask = (hw % thw) != 0                           # static

    def body(ci, carry):
        off = ci * chunk
        if not isinstance(off, int):
            off = pl.multiple_of(off, chunk)
        xc = patches_ref[0, pl.ds(off, chunk), :]         # (chunk, K) bf16
        conv = jnp.dot(xc, wc, preferred_element_type=jnp.float32)
        conv = jnp.maximum(conv + bias, 0.0)              # (chunk, C_pad) f32
        if need_mask:                                     # mask ragged tail
            row = (t * thw + off
                   + jax.lax.broadcasted_iota(jnp.int32, (chunk, 1), 0))
            conv = jnp.where(row < hw, conv, 0.0)
        # per-sublane partial sums: pure VPU vadds into the (8, C_pad) acc.
        acc_ref[...] += conv.reshape(chunk // 8, 8, c_pad).sum(axis=0)
        return carry

    if n_chunks > 1:
        jax.lax.fori_loop(0, n_chunks, body, 0, unroll=True)
    else:
        body(0, 0)

    @pl.when(t == pl.num_programs(1) - 1)
    def _():
        # single cross-sublane (XLU) reduce, once per image.
        pooled_ref[0] = jnp.sum(acc_ref[...], axis=0, keepdims=True) * inv_hw


# ------------------------------ glue (JAX) ---------------------------------
def im2col_3x3_same(x_nchw):
    """[B, C, H, W] -> [B, H*W, C*9] patches (3x3, padding=1, stride=1)."""
    B, C, H, W = x_nchw.shape
    xp = jnp.pad(x_nchw, ((0, 0), (0, 0), (1, 1), (1, 1)))
    cols = []
    for dh in range(3):
        for dw in range(3):
            cols.append(xp[:, :, dh:dh + H, dw:dw + W])   # [B, C, H, W]
    col = jnp.stack(cols, axis=2)                         # [B, C, 9, H, W]
    col = col.transpose(0, 3, 4, 1, 2)                    # [B, H, W, C, 9]
    return col.reshape(B, H * W, C * 9)


def base_cnn_forward(x_nchw, w_conv, b_conv, w_fc, b_fc):
    """Forward pass. x_nchw: [B, C_in, H, W] float32 -> [B, num_classes]."""
    B, C_in, H, W = x_nchw.shape
    C_out = w_conv.shape[0]
    HW = H * W
    K = C_in * 9
    C_pad = _round_up(C_out, 128)

    # --- patches: (B, HW, K) bf16, NO lane padding in HBM. ------------------
    patches = im2col_3x3_same(x_nchw).astype(jnp.bfloat16)

    # --- conv weights (K, C_pad) bf16, bias (1, C_pad) f32. -----------------
    wc_p = jnp.zeros((K, C_pad), jnp.float32)
    wc_p = wc_p.at[:, :C_out].set(w_conv.reshape(C_out, K).T)
    wc_p = wc_p.astype(jnp.bfloat16)
    bc_p = jnp.zeros((1, C_pad), jnp.float32).at[0, :C_out].set(b_conv)

    THW = _pick_hw_tile(HW, K, C_pad)
    n_tiles = pl.cdiv(HW, THW)
    CHUNK = min(THW, _MAX_CHUNK_ROWS)

    kernel = functools.partial(conv_pool_kernel, hw=HW, thw=THW, chunk=CHUNK,
                               inv_hw=1.0 / HW)

    flops = 2 * B * n_tiles * THW * K * C_pad
    bytes_accessed = (patches.size * 2 + wc_p.size * 2 + bc_p.size * 4
                      + B * C_pad * 4)

    pooled = pl.pallas_call(
        kernel,
        out_shape=jax.ShapeDtypeStruct((B, 1, C_pad), jnp.float32),
        grid=(B, n_tiles),
        in_specs=[
            pl.BlockSpec((1, THW, K), lambda b, t: (b, t, 0)),
            pl.BlockSpec((K, C_pad), lambda b, t: (0, 0)),
            pl.BlockSpec((1, C_pad), lambda b, t: (0, 0)),
        ],
        out_specs=pl.BlockSpec((1, 1, C_pad), lambda b, t: (b, 0, 0)),
        scratch_shapes=[pltpu.VMEM((8, C_pad), jnp.float32)],
        compiler_params=pltpu.CompilerParams(
            dimension_semantics=("parallel", "arbitrary"),
            vmem_limit_bytes=32 * 1024 * 1024),
        cost_estimate=pl.CostEstimate(
            flops=flops, transcendentals=0, bytes_accessed=bytes_accessed),
    )(patches, wc_p, bc_p)

    pooled = pooled[:, 0, :C_out]
    # Tiny FC as one batched XLA matmul with exact f32 bias (perf-review item).
    return pooled @ w_fc.T + b_fc[None, :]


# --------------------------- pure-JAX reference ----------------------------
def base_cnn_forward_ref(x_nchw, w_conv, b_conv, w_fc, b_fc):
    y = jax.lax.conv_general_dilated(
        x_nchw, w_conv, window_strides=(1, 1), padding="SAME",
        dimension_numbers=("NCHW", "OIHW", "NCHW"))
    y = jnp.maximum(y + b_conv[None, :, None, None], 0.0)
    pooled = jnp.mean(y, axis=(2, 3))                     # [B, C_out]
    return pooled @ w_fc.T + b_fc[None, :]


# --------------------------------- main ------------------------------------
if __name__ == "__main__":
    B, C_in, H, W = 2, 4, 16, 16
    C_out = 8
    num_classes = 10

    key = jax.random.PRNGKey(0)
    k_x, k_wc, k_bc, k_wf, k_bf = jax.random.split(key, 5)

    x = jax.random.normal(k_x, (B, C_in, H, W), dtype=jnp.float32)
    # PyTorch-layout parameters (deterministic synthetic init).
    w_conv = jax.random.normal(k_wc, (C_out, C_in, 3, 3), jnp.float32) * 0.1
    b_conv = jax.random.normal(k_bc, (C_out,), jnp.float32) * 0.1
    w_fc = jax.random.normal(k_wf, (num_classes, C_out), jnp.float32) * 0.1
    b_fc = jax.random.normal(k_bf, (num_classes,), jnp.float32) * 0.1

    logits = jax.block_until_ready(
        base_cnn_forward(x, w_conv, b_conv, w_fc, b_fc))
    ref = jax.block_until_ready(
        base_cnn_forward_ref(x, w_conv, b_conv, w_fc, b_fc))

    assert logits.shape == (B, num_classes), logits.shape
    # bf16 conv inputs (f32 accumulation) -> relaxed tolerance vs f32 reference.
    max_err = float(jnp.max(jnp.abs(logits - ref)))
    assert jnp.allclose(logits, ref, atol=2e-2, rtol=2e-2), (
        f"mismatch: max abs err {max_err}")

    print("KERNEL_OK")
</pallas_src>

<mosaic_0001>
module attributes {stable_mosaic.version = 11 : i64} {
  func.func @conv_pool_kernel(%arg0: i32, %arg1: i32, %arg2: memref<1x256x36xbf16, #tpu.memory_space<vmem>>, %arg3: memref<36x128xbf16, #tpu.memory_space<vmem>>, %arg4: memref<1x128xf32, #tpu.memory_space<vmem>>, %arg5: memref<1x1x128xf32, #tpu.memory_space<vmem>>, %arg6: memref<8x128xf32, #tpu.memory_space<vmem>>) attributes {dimension_semantics = [#tpu.dimension_semantics<parallel>, #tpu.dimension_semantics<arbitrary>], iteration_bounds = array<i64: 2, 1>, scalar_prefetch = 0 : i64, scratch_operands = 1 : i64, tpu.core_type = #tpu.core_type<tc>, window_params = [{transform_indices = @transform_0, window_bounds = array<i64: 1, 256, 36>}, {pipeline_mode = #tpu.pipeline_mode<synchronous>, transform_indices = @transform_1, window_bounds = array<i64: 36, 128>}, {pipeline_mode = #tpu.pipeline_mode<synchronous>, transform_indices = @transform_2, window_bounds = array<i64: 1, 128>}, {transform_indices = @transform_3, window_bounds = array<i64: 1, 1, 128>}]} {
    %c0_i32 = arith.constant 0 : i32
    %0 = arith.cmpi eq, %arg1, %c0_i32 : i32
    %1 = arith.extui %0 : i1 to i32
    %c0_i32_0 = arith.constant 0 : i32
    %2 = arith.cmpi ne, %1, %c0_i32_0 : i32
    scf.if %2 {
      %cst_15 = arith.constant 0.000000e+00 : f32
      %20 = vector.broadcast %cst_15 : f32 to vector<8x128xf32>
      %c0_16 = arith.constant 0 : index
      %c0_17 = arith.constant 0 : index
      %21 = vector.load %arg6[%c0_16, %c0_17] : memref<8x128xf32, #tpu.memory_space<vmem>>, vector<8x128xf32>
      tpu.vector_store %arg6[%c0_16, %c0_17], %20 {strides = array<i32>} : memref<8x128xf32, #tpu.memory_space<vmem>>, vector<8x128xf32>,
    } else {
    }
    %c0 = arith.constant 0 : index
    %c0_1 = arith.constant 0 : index
    %3 = vector.load %arg3[%c0, %c0_1] : memref<36x128xbf16, #tpu.memory_space<vmem>>, vector<36x128xbf16>
    %c0_2 = arith.constant 0 : index
    %c0_3 = arith.constant 0 : index
    %4 = vector.load %arg4[%c0_2, %c0_3] : memref<1x128xf32, #tpu.memory_space<vmem>>, vector<1x128xf32>
    %c0_4 = arith.constant 0 : index
    %c0_5 = arith.constant 0 : index
    %c0_6 = arith.constant 0 : index
    %5 = vector.load %arg2[%c0_4, %c0_5, %c0_6] : memref<1x256x36xbf16, #tpu.memory_space<vmem>>, vector<1x256x36xbf16>
    %6 = vector.shape_cast %5 : vector<1x256x36xbf16> to vector<256x36xbf16>
    %cst = arith.constant dense<0.000000e+00> : vector<256x128xf32>
    %7 = tpu.matmul %6, %3, %cst {dimension_numbers = #tpu.dot_dimension_numbers<[1], [0], [0], [1], [0, 0, 1, 1], [], []>} : vector<256x36xbf16>, vector<36x128xbf16>, vector<256x128xf32> -> vector<256x128xf32>
    %8 = vector.broadcast %4 : vector<1x128xf32> to vector<256x128xf32>
    %9 = arith.addf %7, %8 : vector<256x128xf32>
    %cst_7 = arith.constant 0.000000e+00 : f32
    %10 = vector.broadcast %cst_7 : f32 to vector<256x128xf32>
    %11 = arith.maximumf %9, %10 : vector<256x128xf32>
    %c0_8 = arith.constant 0 : index
    %c0_9 = arith.constant 0 : index
    %12 = vector.load %arg6[%c0_8, %c0_9] : memref<8x128xf32, #tpu.memory_space<vmem>>, vector<8x128xf32>
    %13 = vector.shape_cast %11 : vector<256x128xf32> to vector<32x8x128xf32>
    %cst_10 = arith.constant dense<0.000000e+00> : vector<8x128xf32>
    %14 = vector.multi_reduction <add>, %13, %cst_10 [0] : vector<32x8x128xf32> to vector<8x128xf32>
    %15 = arith.addf %12, %14 : vector<8x128xf32>
    %c0_11 = arith.constant 0 : index
    %c0_12 = arith.constant 0 : index
    %16 = vector.load %arg6[%c0_11, %c0_12] : memref<8x128xf32, #tpu.memory_space<vmem>>, vector<8x128xf32>
    tpu.vector_store %arg6[%c0_11, %c0_12], %15 {strides = array<i32>} : memref<8x128xf32, #tpu.memory_space<vmem>>, vector<8x128xf32>,
    %c0_i32_13 = arith.constant 0 : i32
    %17 = arith.cmpi eq, %arg1, %c0_i32_13 : i32
    %18 = arith.extui %17 : i1 to i32
    %c0_i32_14 = arith.constant 0 : i32
    %19 = arith.cmpi ne, %18, %c0_i32_14 : i32
    scf.if %19 {
      %c0_15 = arith.constant 0 : index
      %c0_16 = arith.constant 0 : index
      %20 = vector.load %arg6[%c0_15, %c0_16] : memref<8x128xf32, #tpu.memory_space<vmem>>, vector<8x128xf32>
      %cst_17 = arith.constant dense<0.000000e+00> : vector<128xf32>
      %21 = vector.multi_reduction <add>, %20, %cst_17 [0] : vector<8x128xf32> to vector<128xf32>
      %22 = vector.shape_cast %21 : vector<128xf32> to vector<1x128xf32>
      %cst_18 = arith.constant 3.906250e-03 : f32
      %23 = vector.broadcast %cst_18 : f32 to vector<1x128xf32>
      %24 = arith.mulf %22, %23 : vector<1x128xf32>
      %c0_19 = arith.constant 0 : index
      %c0_20 = arith.constant 0 : index
      %c0_21 = arith.constant 0 : index
      %25 = vector.load %arg5[%c0_19, %c0_20, %c0_21] : memref<1x1x128xf32, #tpu.memory_space<vmem>>, vector<1x1x128xf32>
      %26 = vector.shape_cast %25 : vector<1x1x128xf32> to vector<1x128xf32>
      %27 = vector.shape_cast %24 : vector<1x128xf32> to vector<1x1x128xf32>
      tpu.vector_store %arg5[%c0_19, %c0_20, %c0_21], %27 {strides = array<i32>} : memref<1x1x128xf32, #tpu.memory_space<vmem>>, vector<1x1x128xf32>,
    } else {
    }
    return
  }
  func.func @transform_0(%arg0: i32, %arg1: i32) -> (i32, i32, i32) {
    %c0_i32 = arith.constant 0 : i32
    %c0_i32_0 = arith.constant 0 : i32
    return %arg0, %arg1, %c0_i32 : i32, i32, i32
  }
  func.func @transform_1(%arg0: i32, %arg1: i32) -> (i32, i32) {
    %c0_i32 = arith.constant 0 : i32
    %c0_i32_0 = arith.constant 0 : i32
    %c0_i32_1 = arith.constant 0 : i32
    return %c0_i32, %c0_i32_0 : i32, i32
  }
  func.func @transform_2(%arg0: i32, %arg1: i32) -> (i32, i32) {
    %c0_i32 = arith.constant 0 : i32
    %c0_i32_0 = arith.constant 0 : i32
    %c0_i32_1 = arith.constant 0 : i32
    return %c0_i32, %c0_i32_0 : i32, i32
  }
  func.func @transform_3(%arg0: i32, %arg1: i32) -> (i32, i32, i32) {
    %c0_i32 = arith.constant 0 : i32
    %c0_i32_0 = arith.constant 0 : i32
    %c0_i32_1 = arith.constant 0 : i32
    return %arg0, %c0_i32, %c0_i32_0 : i32, i32, i32
  }
}

</mosaic_0001>

<llo_original>
// kernel: tpu_custom_call.1
$region0: #{tpu_custom_call.1}
  #allocation0 [shape = 'u32[]', space=smem, size = 0x4, offset = 0x4, fixed_abs, tag = 'smem constant byte address 0x4 - core index']
  #allocation1 [shape = 'u32[144,128]{1,0:T(1,128)}', space=vmem, size = 0x12000, scoped, tag = 'internal scratch']
  #allocation2 [shape = 'f32[8,128]{1,0:T(8,128)}', space=vmem, size = 0x1000, scoped, tag = 'scratch operand']
  %s0 = inlined_call_operand.vmem [shape: bf16[2,256,36], index: 0, kind: input, shape index: {}]
  %s1 = inlined_call_operand.vmem [shape: bf16[36,128], index: 1, kind: input, shape index: {}]
  %s2 = inlined_call_operand.vmem [shape: f32[1,128], index: 2, kind: input, shape index: {}]
  %s3 = inlined_call_operand.hbm [shape: f32[2,1,128], index: 3, kind: output, shape index: {}]
  %s4 = sld [smem:[#allocation0]]
  $region53: #{tpu_custom_call.1} parent=0
    _
  %s6 = ssub.s32 1, %s4
  %s7 = scalar_select 0, %s6, %s4
  $region1: #{tpu_custom_call.1} parent=0
    #allocation3 [shape = 'u8[1024]{0}', space=vmem, size = 0x400, scoped, tag = 'output window, operand 0']
    #allocation4 [shape = 's32[2]{0}', space=sflag, size = 0x8, scoped, tag = 'scoped memory for tpu_custom_call.1']
    %8 = vsyncpa [#allocation4], 0
    %s9 = scalar_lea.sflag [#allocation4], 1
    %10 = vsyncpa %s9, 0
    loop: start=0, step=1, limit=4
    $region2: #{tpu_custom_call.1} parent=1 // loop_pre_header
      _
    $region3: #{tpu_custom_call.1} parent=1 // loop_header
      %s12 = sphi 0, %s16
      %p13 = scmp.ge.s32.totalorder %s12, 4
      %s19 = sphi 0, %s31
      %s20 = sphi 0, %s27
      %s21 = sphi 0, %s19
      %s22 = sphi 0, %s20
      %s23 = sphi 0, %s21
      %s24 = sphi 0, %s22
      %s36 = sphi 0, %s38
      %s39 = sphi 0, %s36
      %s40 = sphi 0, %s39
      %s56 = sphi 0, %s40
      %s60 = sphi 0, %s60
      %s62 = sphi 0, %s60
      %s63 = sphi 0, %s62
      %s77 = sphi 0, %s63
      %s81 = sphi 0, %s81
      %s83 = sphi 0, %s81
      %s84 = sphi 0, %s83
      %s98 = sphi 0, %s84
      %s104 = sphi 0, %s106
      %s107 = sphi 0, %s104
      %s108 = sphi 0, %s107
      %s124 = sphi 0, %s108
    $region4: #{tpu_custom_call.1} parent=1 // loop_header_branch
      %15 = sbr.rel (%p13) target = $region8
    $region5: #{tpu_custom_call.1} parent=1 // loop_body
      %s17 = ssub.s32 %s12, 1
      %s18 = ssub.s32 %s12, 2
      %s25 = sadd.s32 1, %s20
      %p26 = scmp.ge.s32.totalorder %s25, 1
      %s27 = scalar_select %p26, 0, %s25
      %s28 = sadd.s32 1, %s19
      %s29 = scalar_select %p26, %s28, %s19
      %p30 = scmp.ge.s32.totalorder %s29, 2
      %s31 = scalar_select %p30, 0, %s29
      %s32 = ssub.s32 %s19, %s31
      %s33 = ssub.s32 %s20, %s27
      %s34 = sor.u32 %s32, %s33
      %p35 = scmp.eq.s32.totalorder %s34, 0
      %s37 = sadd.s32 %s36, 1
      %s38 = scalar_select %p35, %s36, %s37
      %p41 = pneg %p35
      %p42 = scmp.eq.s32.totalorder %s12, 1
      %p43 = por %p41, %p42
      %p44 = scmp.ne.s32.totalorder %s36, %s39
      %p45 = scmp.eq.s32.totalorder %s12, 0
      %p46 = por %p44, %p45
      %p47 = scmp.ne.s32.totalorder %s36, %s39
      %p48 = scmp.eq.s32.totalorder %s17, 1
      %p49 = por %p47, %p48
      %p50 = scmp.ne.s32.totalorder %s39, %s40
      %p51 = scmp.eq.s32.totalorder %s17, 0
      %p52 = por %p50, %p51
      %p53 = scmp.ne.s32.totalorder %s39, %s40
      %p54 = scmp.eq.s32.totalorder %s18, 1
      %p55 = por %p53, %p54
      %p57 = scmp.ne.s32.totalorder %s40, %s56
      %p58 = scmp.eq.s32.totalorder %s18, 0
      %p59 = por %p57, %p58
      %s61 = sadd.s32 %s60, 1
      %p64 = scmp.eq.s32.totalorder %s12, 1
      %p65 = scmp.ne.s32.totalorder %s60, %s62
      %p66 = scmp.eq.s32.totalorder %s12, 0
      %p67 = por %p65, %p66
      %p68 = scmp.ne.s32.totalorder %s60, %s62
      %p69 = scmp.eq.s32.totalorder %s17, 1
      %p70 = por %p68, %p69
      %p71 = scmp.ne.s32.totalorder %s62, %s63
      %p72 = scmp.eq.s32.totalorder %s17, 0
      %p73 = por %p71, %p72
      %p74 = scmp.ne.s32.totalorder %s62, %s63
      %p75 = scmp.eq.s32.totalorder %s18, 1
      %p76 = por %p74, %p75
      %p78 = scmp.ne.s32.totalorder %s63, %s77
      %p79 = scmp.eq.s32.totalorder %s18, 0
      %p80 = por %p78, %p79
      %s82 = sadd.s32 %s81, 1
      %p85 = scmp.eq.s32.totalorder %s12, 1
      %p86 = scmp.ne.s32.totalorder %s81, %s83
      %p87 = scmp.eq.s32.totalorder %s12, 0
      %p88 = por %p86, %p87
      %p89 = scmp.ne.s32.totalorder %s81, %s83
      %p90 = scmp.eq.s32.totalorder %s17, 1
      %p91 = por %p89, %p90
      %p92 = scmp.ne.s32.totalorder %s83, %s84
      %p93 = scmp.eq.s32.totalorder %s17, 0
      %p94 = por %p92, %p93
      %p95 = scmp.ne.s32.totalorder %s83, %s84
      %p96 = scmp.eq.s32.totalorder %s18, 1
      %p97 = por %p95, %p96
      %p99 = scmp.ne.s32.totalorder %s84, %s98
      %p100 = scmp.eq.s32.totalorder %s18, 0
      %p101 = por %p99, %p100
      %s102 = ssub.s32 %s19, %s31
      %p103 = scmp.eq.s32.totalorder %s102, 0
      %s105 = sadd.s32 %s104, 1
      %s106 = scalar_select %p103, %s104, %s105
      %p109 = pneg %p103
      %p110 = scmp.eq.s32.totalorder %s12, 1
      %p111 = por %p109, %p110
      %p112 = scmp.ne.s32.totalorder %s104, %s107
      %p113 = scmp.eq.s32.totalorder %s12, 0
      %p114 = por %p112, %p113
      %p115 = scmp.ne.s32.totalorder %s104, %s107
      %p116 = scmp.eq.s32.totalorder %s17, 1
      %p117 = por %p115, %p116
      %p118 = scmp.ne.s32.totalorder %s107, %s108
      %p119 = scmp.eq.s32.totalorder %s17, 0
      %p120 = por %p118, %p119
      %p121 = scmp.ne.s32.totalorder %s107, %s108
      %p122 = scmp.eq.s32.totalorder %s18, 1
      %p123 = por %p121, %p122
      %p125 = scmp.ne.s32.totalorder %s108, %s124
      %p126 = scmp.eq.s32.totalorder %s18, 0
      %p127 = por %p125, %p126
      %p128 = scmp.le.s32.totalorder 1, %s12
      %p129 = scmp.lt.s32.totalorder %s12, 3
      %p130 = pnand %p128, %p129
      %p131 = pneg %p130
      // Predicated region
      $region9: #{tpu_custom_call.1} parent=5 // pred_check
        _
      $region10: #{tpu_custom_call.1} parent=5 // pred_check_branch
        %133 = sbr.rel (%p130) target = $region12
      $region11: #{tpu_custom_call.1} parent=5 // pred_region
        %s134 = ssub.s32 %s12, 1
        // Predicated region
        $region13: #{tpu_custom_call.1} parent=11 // pred_check
          %p135 = pneg %p73
        $region14: #{tpu_custom_call.1} parent=11 // pred_check_branch
          %137 = sbr.rel (%p135) target = $region16
        $region15: #{tpu_custom_call.1} parent=11 // pred_region
          _
        $region16: #{tpu_custom_call.1} parent=11 // pred_fallthru
          _
        // Predicated region
        $region17: #{tpu_custom_call.1} parent=11 // pred_check
          %p138 = pneg %p94
        $region18: #{tpu_custom_call.1} parent=11 // pred_check_branch
          %140 = sbr.rel (%p138) target = $region20
        $region19: #{tpu_custom_call.1} parent=11 // pred_region
          _
        $region20: #{tpu_custom_call.1} parent=11 // pred_fallthru
          _
      $region12: #{tpu_custom_call.1} parent=5 // pred_fallthru
        _
      %p141 = scmp.lt.s32.totalorder %s12, 2
      // Predicated region
      $region21: #{tpu_custom_call.1} parent=5 // pred_check
        %p142 = pneg %p141
      $region22: #{tpu_custom_call.1} parent=5 // pred_check_branch
        %144 = sbr.rel (%p142) target = $region24
      $region23: #{tpu_custom_call.1} parent=5 // pred_region
        // Predicated region
        $region25: #{tpu_custom_call.1} parent=23 // pred_check
          %p145 = pneg %p46
        $region26: #{tpu_custom_call.1} parent=23 // pred_check_branch
          %147 = sbr.rel (%p145) target = $region28
        $region27: #{tpu_custom_call.1} parent=23 // pred_region
          %s148 = smul.u32 32, %s20
          %p149 = scmp.lt.s32.totalorder %s19, 1
          %s150 = scalar_select %p149, %s19, 1
          %p151 = scmp.lt.s32.totalorder %s148, 31
          %s152 = scalar_select %p151, %s148, 31
          %s153 = smul.addr %s150, 32
          %s154 = sadd.s32 %s152, %s153
          %s155 = smul.addr %s154, 4
          %s156 = scalar_lea.vmem %s0, %s155
          %s157 = smul.u32 32, %s20
        $region28: #{tpu_custom_call.1} parent=23 // pred_fallthru
          _
      $region24: #{tpu_custom_call.1} parent=5 // pred_fallthru
        _
      %p158 = scmp.le.s32.totalorder 1, %s12
      %p159 = scmp.lt.s32.totalorder %s12, 3
      %p160 = pnand %p158, %p159
      %p161 = pneg %p160
      // Predicated region
      $region29: #{tpu_custom_call.1} parent=5 // pred_check
        _
      $region30: #{tpu_custom_call.1} parent=5 // pred_check_branch
        %163 = sbr.rel (%p160) target = $region32
      $region31: #{tpu_custom_call.1} parent=5 // pred_region
        %s164 = ssub.s32 %s12, 1
        %s165 = smul.u32 32, %s22
        %p166 = scmp.lt.s32.totalorder %s21, 1
        %s167 = scalar_select %p166, %s21, 1
        %p168 = scmp.lt.s32.totalorder %s165, 31
        %s169 = scalar_select %p168, %s165, 31
        %s170 = smul.addr %s167, 32
        %s171 = sadd.s32 %s169, %s170
        %s172 = smul.addr %s171, 4
        %s173 = scalar_lea.vmem %s0, %s172
        %p174 = pneg %p52
        %p175 = pneg %p49
        %p176 = pneg %p73
        %p177 = pneg %p70
        %p178 = pneg %p94
        %p179 = pneg %p91
        %p180 = pneg %p120
        %p181 = pneg %p117
        %s182 = sand.u32 %s107, 1
        %s183 = scalar_lea.sflag [#allocation4], %s182
        %s184 = sand.u32 %s107, 1
        %s185 = scalar_lea.vmem [#allocation3], %s184
        %s186 = smul.u32 32, %s22
        %p187 = scmp.lt.s32.totalorder %s21, 1
        %s188 = scalar_select %p187, %s21, 1
        %p189 = scmp.lt.s32.totalorder %s186, 31
        %s190 = scalar_select %p189, %s186, 31
        %s191 = smul.addr %s188, 32
        %s192 = sadd.s32 %s190, %s191
        %s193 = smul.addr %s192, 4
        %s194 = scalar_lea.vmem %s0, %s193
        %s195 = smul.u32 32, %s22
        %p197 = scmp.eq.s32.totalorder %s22, 0
        // Predicated region
        $region33: #{tpu_custom_call.1} parent=31 // pred_check
          %p198 = pneg %p197
        $region34: #{tpu_custom_call.1} parent=31 // pred_check_branch
          %200 = sbr.rel (%p198) target = $region36
        $region35: #{tpu_custom_call.1} parent=31 // pred_region
          %201 = vst [vmem:[#allocation2] sm:$0xff] 0.0
        $region36: #{tpu_custom_call.1} parent=31 // pred_fallthru
          _
        %v202 = vld [vmem:[%s1] sm:$0xf]
        %v203 = vld [vmem:[%s1 + $0x4] sm:$0xf]
        %v204 = vld [vmem:[%s1 + $0x8] sm:$0xf]
        %v205 = vld [vmem:[%s1 + $0xc] sm:$0xf]
        %v206 = vld [vmem:[%s1 + $0x10] sm:$0x3]
        %v207 = vld [vmem:[%s2] sm:$0x1]
        %v208 = vld [vmem:[%s194] sm:$0xf]
        %v209 = vld [vmem:[%s194 + $0x4] sm:$0xf]
        %v210 = vld [vmem:[%s194 + $0x8] sm:$0xf]
        %v211 = vld [vmem:[%s194 + $0xc] sm:$0xf]
        %v212 = vld [vmem:[%s194 + $0x10] sm:$0xf]
        %v213 = vld [vmem:[%s194 + $0x14] sm:$0xf]
        %v214 = vld [vmem:[%s194 + $0x18] sm:$0xf]
        %v215 = vld [vmem:[%s194 + $0x1c] sm:$0xf]
        %v216 = vld [vmem:[%s194 + $0x20] sm:$0xf]
        %v217 = vld [vmem:[%s194 + $0x24] sm:$0xf]
        %v218 = vld [vmem:[%s194 + $0x28] sm:$0xf]
        %v219 = vld [vmem:[%s194 + $0x2c] sm:$0xf]
        %v220 = vld [vmem:[%s194 + $0x30] sm:$0xf]
        %v221 = vld [vmem:[%s194 + $0x34] sm:$0xf]
        %v222 = vld [vmem:[%s194 + $0x38] sm:$0xf]
        %v223 = vld [vmem:[%s194 + $0x3c] sm:$0xf]
        %v224 = vld [vmem:[%s194 + $0x40] sm:$0xf]
        %v225 = vld [vmem:[%s194 + $0x44] sm:$0xf]
        %v226 = vld [vmem:[%s194 + $0x48] sm:$0xf]
        %v227 = vld [vmem:[%s194 + $0x4c] sm:$0xf]
        %v228 = vld [vmem:[%s194 + $0x50] sm:$0xf]
        %v229 = vld [vmem:[%s194 + $0x54] sm:$0xf]
        %v230 = vld [vmem:[%s194 + $0x58] sm:$0xf]
        %v231 = vld [vmem:[%s194 + $0x5c] sm:$0xf]
        %v232 = vld [vmem:[%s194 + $0x60] sm:$0xf]
        %v233 = vld [vmem:[%s194 + $0x64] sm:$0xf]
        %v234 = vld [vmem:[%s194 + $0x68] sm:$0xf]
        %v235 = vld [vmem:[%s194 + $0x6c] sm:$0xf]
        %v236 = vld [vmem:[%s194 + $0x70] sm:$0xf]
        %v237 = vld [vmem:[%s194 + $0x74] sm:$0xf]
        %v238 = vld [vmem:[%s194 + $0x78] sm:$0xf]
        %v239 = vld [vmem:[%s194 + $0x7c] sm:$0xf]
        %v241 = vlaneseq
        %v242 = vshrl.u32 %v241, 7
        %v243 = vsub.s32 0, %v242
        %v244 = vrot.slane %v207, %v243
        %v278 = vunpack.c.l.b16 %v208
        %v279 = vunpack.c.l.b16 %v209
        %v280 = vunpack.c.l.b16 %v210
        %v281 = vunpack.c.l.b16 %v211
        %v282 = vunpack.c.l.b16 %v212
        %v283 = vunpack.c.l.b16 %v213
        %v284 = vunpack.c.l.b16 %v214
        %v285 = vunpack.c.l.b16 %v215
        %v286 = vunpack.c.l.b16 %v216
        %v287 = vunpack.c.l.b16 %v217
        %v288 = vunpack.c.l.b16 %v218
        %v289 = vunpack.c.l.b16 %v219
        %v290 = vunpack.c.l.b16 %v220
        %v291 = vunpack.c.l.b16 %v221
        %v292 = vunpack.c.l.b16 %v222
        %v293 = vunpack.c.l.b16 %v223
        %v294 = vunpack.c.l.b16 %v224
        %v295 = vunpack.c.l.b16 %v225
        %v296 = vunpack.c.l.b16 %v226
        %v297 = vunpack.c.l.b16 %v227
        %v298 = vunpack.c.l.b16 %v228
        %v299 = vunpack.c.l.b16 %v229
        %v300 = vunpack.c.l.b16 %v230
        %v301 = vunpack.c.l.b16 %v231
        %v302 = vunpack.c.l.b16 %v232
        %v303 = vunpack.c.l.b16 %v233
        %v304 = vunpack.c.l.b16 %v234
        %v305 = vunpack.c.l.b16 %v235
        %v306 = vunpack.c.l.b16 %v236
        %v307 = vunpack.c.l.b16 %v237
        %v308 = vunpack.c.l.b16 %v238
        %v309 = vunpack.c.l.b16 %v239
        %v310 = vpack.c.b16 %v279, %v278
        %v311 = vpack.c.b16 %v281, %v280
        %v312 = vpack.c.b16 %v283, %v282
        %v313 = vpack.c.b16 %v285, %v284
        %v314 = vpack.c.b16 %v287, %v286
        %v315 = vpack.c.b16 %v289, %v288
        %v316 = vpack.c.b16 %v291, %v290
        %v317 = vpack.c.b16 %v293, %v292
        %v318 = vpack.c.b16 %v295, %v294
        %v319 = vpack.c.b16 %v297, %v296
        %v320 = vpack.c.b16 %v299, %v298
        %v321 = vpack.c.b16 %v301, %v300
        %v322 = vpack.c.b16 %v303, %v302
        %v323 = vpack.c.b16 %v305, %v304
        %v324 = vpack.c.b16 %v307, %v306
        %v325 = vpack.c.b16 %v309, %v308
        %v331 = vunpack.c.l.b16 %v202
        %v332 = vunpack.c.l.b16 %v203
        %v333 = vunpack.c.l.b16 %v204
        %v334 = vunpack.c.l.b16 %v205
        %v335 = vunpack.c.l.b16 %v206
        %v336 = vpack.c.b16 %v332, %v331
        %v337 = vpack.c.b16 %v334, %v333
        %v338 = vpack.c.b16 %v335, %v335
        %vm341 = vcmask 293888
        %v343 = vsel %vm341, %v310, 0
        %v346 = vsel %vm341, %v311, 0
        %v349 = vsel %vm341, %v312, 0
        %v352 = vsel %vm341, %v313, 0
        %v355 = vsel %vm341, %v314, 0
        %v358 = vsel %vm341, %v315, 0
        %v361 = vsel %vm341, %v316, 0
        %v364 = vsel %vm341, %v317, 0
        %v367 = vsel %vm341, %v318, 0
        %v370 = vsel %vm341, %v319, 0
        %v373 = vsel %vm341, %v320, 0
        %v376 = vsel %vm341, %v321, 0
        %v379 = vsel %vm341, %v322, 0
        %v382 = vsel %vm341, %v323, 0
        %v385 = vsel %vm341, %v324, 0
        %v388 = vsel %vm341, %v325, 0
        %vm390 = vcmask 1041408
        %v392 = vsel %vm390, %v338, 0
        %394 = vmatprep.subr.bf16.mxu0 0
        %395 = vmatpush1.bf16.msra.mxu0 %v336
        %396 = vmatprep.subr.bf16.mxu0 0
        %397 = vmatpush1.bf16.msra.mxu0 %v337
        %398 = vmatprep.subr.bf16.mxu0 0
        %399 = vmatpush1.bf16.msra.mxu0 %v392
        %400 = vmatprep.subr.bf16.mxu0 0
        %401 = vmatpush1.bf16.msra.mxu0 0
        %402 = vmatprep.subr.bf16.mxu0 0
        %403 = vmatpush1.bf16.msra.mxu0 0
        %404 = vmatprep.subr.bf16.mxu0 0
        %405 = vmatpush1.bf16.msra.mxu0 0
        %406 = vmatprep.subr.bf16.mxu0 0
        %407 = vmatpush1.bf16.msra.mxu0 0
        %408 = vmatprep.subr.bf16.mxu0 0
        %409 = vmatpush1.bf16.msra.mxu0 0
        %410 = vmatprep.subr.bf16.mxu0 0
        %411 = vmatpush1.bf16.msra.mxu0 0
        %412 = vmatprep.subr.bf16.mxu0 0
        %413 = vmatpush1.bf16.msra.mxu0 0
        %414 = vmatprep.subr.bf16.mxu0 0
        %415 = vmatpush1.bf16.msra.mxu0 0
        %416 = vmatprep.subr.bf16.mxu0 0
        %417 = vmatpush1.bf16.msra.mxu0 0
        %418 = vmatprep.subr.bf16.mxu0 0
        %419 = vmatpush1.bf16.msra.mxu0 0
        %420 = vmatprep.subr.bf16.mxu0 0
        %421 = vmatpush1.bf16.msra.mxu0 0
        %422 = vmatprep.subr.bf16.mxu0 0
        %423 = vmatpush1.bf16.msra.mxu0 0
        %424 = vmatprep.subr.bf16.mxu0 0
        %425 = vmatpush1.bf16.msra.mxu0 0
        %426 = vmatprep.mubr.bf16.mxu0 0
        %427 = vmatmul.mubr.bf16.gmra.mrb[0].mxu0 %v343
        %v428 = vpop.f32.mrb[0].mxu0
        %v429 = vadd.f32 %v244, %v428
        %v430 = vpop.f32.mrb[0].mxu0
        %v431 = vpop.f32.mrb[0].mxu0
        %v432 = vadd.f32 %v244, %v431
        %v433 = vpop.f32.mrb[0].mxu0
        %434 = vmatprep.mubr.bf16.mxu0 0
        %435 = vmatmul.mubr.bf16.gmra.mrb[0].mxu0 %v346
        %v436 = vpop.f32.mrb[0].mxu0
        %v437 = vadd.f32 %v244, %v436
        %v438 = vpop.f32.mrb[0].mxu0
        %v439 = vpop.f32.mrb[0].mxu0
        %v440 = vadd.f32 %v244, %v439
        %v441 = vpop.f32.mrb[0].mxu0
        %442 = vmatprep.mubr.bf16.mxu0 0
        %443 = vmatmul.mubr.bf16.gmra.mrb[0].mxu0 %v349
        %v444 = vpop.f32.mrb[0].mxu0
        %v445 = vadd.f32 %v244, %v444
        %v446 = vpop.f32.mrb[0].mxu0
        %v447 = vpop.f32.mrb[0].mxu0
        %v448 = vadd.f32 %v244, %v447
        %v449 = vpop.f32.mrb[0].mxu0
        %450 = vmatprep.mubr.bf16.mxu0 0
        %451 = vmatmul.mubr.bf16.gmra.mrb[0].mxu0 %v352
        %v452 = vpop.f32.mrb[0].mxu0
        %v453 = vadd.f32 %v244, %v452
        %v454 = vpop.f32.mrb[0].mxu0
        %v455 = vpop.f32.mrb[0].mxu0
        %v456 = vadd.f32 %v244, %v455
        %v457 = vpop.f32.mrb[0].mxu0
        %458 = vmatprep.mubr.bf16.mxu0 0
        %459 = vmatmul.mubr.bf16.gmra.mrb[0].mxu0 %v355
        %v460 = vpop.f32.mrb[0].mxu0
        %v461 = vadd.f32 %v244, %v460
        %v462 = vpop.f32.mrb[0].mxu0
        %v463 = vpop.f32.mrb[0].mxu0
        %v464 = vadd.f32 %v244, %v463
        %v465 = vpop.f32.mrb[0].mxu0
        %466 = vmatprep.mubr.bf16.mxu0 0
        %467 = vmatmul.mubr.bf16.gmra.mrb[0].mxu0 %v358
        %v468 = vpop.f32.mrb[0].mxu0
        %v469 = vadd.f32 %v244, %v468
        %v470 = vpop.f32.mrb[0].mxu0
        %v471 = vpop.f32.mrb[0].mxu0
        %v472 = vadd.f32 %v244, %v471
        %v473 = vpop.f32.mrb[0].mxu0
        %474 = vmatprep.mubr.bf16.mxu0 0
        %475 = vmatmul.mubr.bf16.gmra.mrb[0].mxu0 %v361
        %v476 = vpop.f32.mrb[0].mxu0
        %v477 = vadd.f32 %v244, %v476
        %v478 = vpop.f32.mrb[0].mxu0
        %v479 = vpop.f32.mrb[0].mxu0
        %v480 = vadd.f32 %v244, %v479
        %v481 = vpop.f32.mrb[0].mxu0
        %482 = vmatprep.mubr.bf16.mxu0 0
        %483 = vmatmul.mubr.bf16.gmra.mrb[0].mxu0 %v364
        %v484 = vpop.f32.mrb[0].mxu0
        %v485 = vadd.f32 %v244, %v484
        %v486 = vpop.f32.mrb[0].mxu0
        %v487 = vpop.f32.mrb[0].mxu0
        %v488 = vadd.f32 %v244, %v487
        %v489 = vpop.f32.mrb[0].mxu0
        %490 = vmatprep.mubr.bf16.mxu0 0
        %491 = vmatmul.mubr.bf16.gmra.mrb[0].mxu0 %v367
        %v492 = vpop.f32.mrb[0].mxu0
        %v493 = vadd.f32 %v244, %v492
        %v494 = vpop.f32.mrb[0].mxu0
        %v495 = vpop.f32.mrb[0].mxu0
        %v496 = vadd.f32 %v244, %v495
        %v497 = vpop.f32.mrb[0].mxu0
        %498 = vmatprep.mubr.bf16.mxu0 0
        %499 = vmatmul.mubr.bf16.gmra.mrb[0].mxu0 %v370
        %v500 = vpop.f32.mrb[0].mxu0
        %v501 = vadd.f32 %v244, %v500
        %v502 = vpop.f32.mrb[0].mxu0
        %v503 = vpop.f32.mrb[0].mxu0
        %v504 = vadd.f32 %v244, %v503
        %v505 = vpop.f32.mrb[0].mxu0
        %506 = vmatprep.mubr.bf16.mxu0 0
        %507 = vmatmul.mubr.bf16.gmra.mrb[0].mxu0 %v373
        %v508 = vpop.f32.mrb[0].mxu0
        %v509 = vadd.f32 %v244, %v508
        %v510 = vpop.f32.mrb[0].mxu0
        %v511 = vpop.f32.mrb[0].mxu0
        %v512 = vadd.f32 %v244, %v511
        %v513 = vpop.f32.mrb[0].mxu0
        %514 = vmatprep.mubr.bf16.mxu0 0
        %515 = vmatmul.mubr.bf16.gmra.mrb[0].mxu0 %v376
        %v516 = vpop.f32.mrb[0].mxu0
        %v517 = vadd.f32 %v244, %v516
        %v518 = vpop.f32.mrb[0].mxu0
        %v519 = vpop.f32.mrb[0].mxu0
        %v520 = vadd.f32 %v244, %v519
        %v521 = vpop.f32.mrb[0].mxu0
        %522 = vmatprep.mubr.bf16.mxu0 0
        %523 = vmatmul.mubr.bf16.gmra.mrb[0].mxu0 %v379
        %v524 = vpop.f32.mrb[0].mxu0
        %v525 = vadd.f32 %v244, %v524
        %v526 = vpop.f32.mrb[0].mxu0
        %v527 = vpop.f32.mrb[0].mxu0
        %v528 = vadd.f32 %v244, %v527
        %v529 = vpop.f32.mrb[0].mxu0
        %530 = vmatprep.mubr.bf16.mxu0 0
        %531 = vmatmul.mubr.bf16.gmra.mrb[0].mxu0 %v382
        %v532 = vpop.f32.mrb[0].mxu0
        %v533 = vadd.f32 %v244, %v532
        %v534 = vpop.f32.mrb[0].mxu0
        %v535 = vpop.f32.mrb[0].mxu0
        %v536 = vadd.f32 %v244, %v535
        %v537 = vpop.f32.mrb[0].mxu0
        %538 = vmatprep.mubr.bf16.mxu0 0
        %539 = vmatmul.mubr.bf16.gmra.mrb[0].mxu0 %v385
        %v540 = vpop.f32.mrb[0].mxu0
        %v541 = vadd.f32 %v244, %v540
        %v542 = vpop.f32.mrb[0].mxu0
        %v543 = vpop.f32.mrb[0].mxu0
        %v544 = vadd.f32 %v244, %v543
        %v545 = vpop.f32.mrb[0].mxu0
        %546 = vmatprep.mubr.bf16.mxu0 0
        %547 = vmatmul.mubr.bf16.gmra.mrb[0].mxu0 %v388
        %v548 = vpop.f32.mrb[0].mxu0
        %v549 = vadd.f32 %v244, %v548
        %v550 = vpop.f32.mrb[0].mxu0
        %v551 = vpop.f32.mrb[0].mxu0
        %v552 = vadd.f32 %v244, %v551
        %v553 = vpop.f32.mrb[0].mxu0
        %554 = vdwg.mxu0
        %v555 = vmax.f32 %v429, 0.0
        %v556 = vmax.f32 %v432, 0.0
        %v557 = vmax.f32 %v437, 0.0
        %v558 = vmax.f32 %v440, 0.0
        %v559 = vmax.f32 %v445, 0.0
        %v560 = vmax.f32 %v448, 0.0
        %v561 = vmax.f32 %v453, 0.0
        %v562 = vmax.f32 %v456, 0.0
        %v563 = vmax.f32 %v461, 0.0
        %v564 = vmax.f32 %v464, 0.0
        %v565 = vmax.f32 %v469, 0.0
        %v566 = vmax.f32 %v472, 0.0
        %v567 = vmax.f32 %v477, 0.0
        %v568 = vmax.f32 %v480, 0.0
        %v569 = vmax.f32 %v485, 0.0
        %v570 = vmax.f32 %v488, 0.0
        %v571 = vmax.f32 %v493, 0.0
        %v572 = vmax.f32 %v496, 0.0
        %v573 = vmax.f32 %v501, 0.0
        %v574 = vmax.f32 %v504, 0.0
        %v575 = vmax.f32 %v509, 0.0
        %v576 = vmax.f32 %v512, 0.0
        %v577 = vmax.f32 %v517, 0.0
        %v578 = vmax.f32 %v520, 0.0
        %v579 = vmax.f32 %v525, 0.0
        %v580 = vmax.f32 %v528, 0.0
        %v581 = vmax.f32 %v533, 0.0
        %v582 = vmax.f32 %v536, 0.0
        %v583 = vmax.f32 %v541, 0.0
        %v584 = vmax.f32 %v544, 0.0
        %v585 = vmax.f32 %v549, 0.0
        %v586 = vmax.f32 %v552, 0.0
        %v587 = vld [vmem:[#allocation2] sm:$0xff]
        %v588 = vadd.f32 %v555, %v556
        %v589 = vadd.f32 %v588, %v557
        %v590 = vadd.f32 %v589, %v558
        %v591 = vadd.f32 %v590, %v559
        %v592 = vadd.f32 %v591, %v560
        %v593 = vadd.f32 %v592, %v561
        %v594 = vadd.f32 %v593, %v562
        %v595 = vadd.f32 %v594, %v563
        %v596 = vadd.f32 %v595, %v564
        %v597 = vadd.f32 %v596, %v565
        %v598 = vadd.f32 %v597, %v566
        %v599 = vadd.f32 %v598, %v567
        %v600 = vadd.f32 %v599, %v568
        %v601 = vadd.f32 %v600, %v569
        %v602 = vadd.f32 %v601, %v570
        %v603 = vadd.f32 %v602, %v571
        %v604 = vadd.f32 %v603, %v572
        %v605 = vadd.f32 %v604, %v573
        %v606 = vadd.f32 %v605, %v574
        %v607 = vadd.f32 %v606, %v575
        %v608 = vadd.f32 %v607, %v576
        %v609 = vadd.f32 %v608, %v577
        %v610 = vadd.f32 %v609, %v578
        %v611 = vadd.f32 %v610, %v579
        %v612 = vadd.f32 %v611, %v580
        %v613 = vadd.f32 %v612, %v581
        %v614 = vadd.f32 %v613, %v582
        %v615 = vadd.f32 %v614, %v583
        %v616 = vadd.f32 %v615, %v584
        %v617 = vadd.f32 %v616, %v585
        %v618 = vadd.f32 %v617, %v586
        %v619 = vadd.f32 %v587, %v618
        %620 = vst [vmem:[#allocation2] sm:$0xff] %v619
        // Predicated region
        $region37: #{tpu_custom_call.1} parent=31 // pred_check
          %p621 = pneg %p197
        $region38: #{tpu_custom_call.1} parent=31 // pred_check_branch
          %623 = sbr.rel (%p621) target = $region40
        $region39: #{tpu_custom_call.1} parent=31 // pred_region
          %v624 = vld [vmem:[#allocation2] sm:$0xff]
          %v625 = vrot.slane %v624, 4
          %v626 = vadd.f32 %v624, %v625
          %v627 = vrot.slane %v626, 2
          %v628 = vadd.f32 %v626, %v627
          %v629 = vrot.slane %v628, 1
          %v630 = vadd.f32 %v628, %v629
          %v631 = vmul.f32 %v630, 0.00390625
          %632 = vst [vmem:[%s185] sm:$0x1] %v631
        $region40: #{tpu_custom_call.1} parent=31 // pred_fallthru
          _
        %s633 = sand.u32 %s107, 1
        %s634 = scalar_lea.sflag [#allocation4], %s633
        %s635 = sand.u32 %s107, 1
        %s636 = scalar_lea.vmem [#allocation3], %s635
        // Predicated region
        $region41: #{tpu_custom_call.1} parent=31 // pred_check
          %p637 = pneg %p117
        $region42: #{tpu_custom_call.1} parent=31 // pred_check_branch
          %639 = sbr.rel (%p637) target = $region44
        $region43: #{tpu_custom_call.1} parent=31 // pred_region
          %s641 = ssub.s32 16, 16
          %642 = vsyncadd %s634, %s641
          %s643 = smul.addr %s21, 16
          %s644 = scalar_lea.hbm %s3, %s643
          %s646 = sshll.u32 %s636, 4
          %s647 = int_to_ptr.vmem [resolvable:$true] %s646
          %649 = dma.vmem_to_hbm [thread:$0]  %s647, 16, %s644, %s634
        $region44: #{tpu_custom_call.1} parent=31 // pred_fallthru
          _
      $region32: #{tpu_custom_call.1} parent=5 // pred_fallthru
        _
      %p650 = scmp.le.s32.totalorder 2, %s12
      // Predicated region
      $region45: #{tpu_custom_call.1} parent=5 // pred_check
        %p651 = pneg %p650
      $region46: #{tpu_custom_call.1} parent=5 // pred_check_branch
        %653 = sbr.rel (%p651) target = $region48
      $region47: #{tpu_custom_call.1} parent=5 // pred_region
        %s654 = ssub.s32 %s12, 2
        // Predicated region
        $region49: #{tpu_custom_call.1} parent=47 // pred_check
          %p655 = pneg %p123
        $region50: #{tpu_custom_call.1} parent=47 // pred_check_branch
          %657 = sbr.rel (%p655) target = $region52
        $region51: #{tpu_custom_call.1} parent=47 // pred_region
          %s658 = sand.u32 %s108, 1
          %s659 = scalar_lea.sflag [#allocation4], %s658
          %s660 = sand.u32 %s108, 1
          %s661 = scalar_lea.vmem [#allocation3], %s660
          %662 = dma.done %s659, 16
        $region52: #{tpu_custom_call.1} parent=47 // pred_fallthru
          _
      $region48: #{tpu_custom_call.1} parent=5 // pred_fallthru
        _
    $region6: #{tpu_custom_call.1} parent=1 // loop_footer
      %s16 = sadd.s32 1, %s12
    $region7: #{tpu_custom_call.1} parent=1 // loop_footer_branch
      %11 = sbr.rel target = $region3
    $region8: #{tpu_custom_call.1} parent=1 // loop_exit
      _
    %663 = vsyncpa [#allocation4], 1
    %s664 = scalar_lea.sflag [#allocation4], 1
    %665 = vsyncpa %s664, 1

</llo_original>
